<compile_context>
chip_gen: v7x
topology: tpu7x:2x2x1
jax: 0.10.0
libtpu: 0.0.40
codegen_flags: <defaults>
</compile_context>

<pallas_src>
import math

import jax
import jax.numpy as jnp
from jax import lax
from jax.experimental import pallas as pl
from jax.experimental.pallas import tpu as pltpu


def _vmem_capacity_bytes():
    try:
        return int(pltpu.get_tpu_info().vmem_capacity_bytes)
    except Exception:
        return 64 * 1024 * 1024          # conservative (v7x per-core VMEM)


def _pick_tile(n, target, align=8):
    """Largest multiple of `align` that divides n and is <= target, else n."""
    t = min(target, n)
    t -= t % align
    while t >= align:
        if n % t == 0:
            return t
        t -= align
    return n


# ---------------------------------------------------------------------------
# Kernel 1: negative squared pairwise distance (the kNN hot matmul)
#   pd[n, i, j] = 2 x_i.x_j - ||x_i||^2 - ||x_j||^2
# Queries in channels-last tiles (tq, C); keys channels-first (C, L) so the
# key norms are a cheap sublane reduce and L sits dense in the lane dim.
# Kept in f32: kNN ordering must match the f32 reference (no bf16 tie flips).
# ---------------------------------------------------------------------------
def _pairwise_dist_kernel(xq_ref, xk_ref, pd_ref):
    xq = xq_ref[0]                                                  # (tq, C)
    xk = xk_ref[0]                                                  # (C, L)
    inner = jnp.dot(xq, xk, preferred_element_type=jnp.float32)     # (tq, L) MXU
    k_norm = jnp.sum(xk * xk, axis=0, keepdims=True)                # (1, L)
    q_norm = jnp.sum(xq * xq, axis=1, keepdims=True)                # (tq, 1)
    pd_ref[0] = 2.0 * inner - q_norm - k_norm


def pairwise_distance(xt, x, *, tq, vmem_limit):
    N, L, C = xt.shape
    return pl.pallas_call(
        _pairwise_dist_kernel,
        out_shape=jax.ShapeDtypeStruct((N, L, L), jnp.float32),
        grid_spec=pltpu.PrefetchScalarGridSpec(
            num_scalar_prefetch=0,
            grid=(N, L // tq),
            in_specs=[
                pl.BlockSpec((1, tq, C), lambda n, i: (n, i, 0)),   # query tile
                pl.BlockSpec((1, C, L), lambda n, i: (n, 0, 0)),    # all keys (resident)
            ],
            out_specs=pl.BlockSpec((1, tq, L), lambda n, i: (n, i, 0)),
        ),
        compiler_params=pltpu.CompilerParams(
            dimension_semantics=("parallel", "parallel"),
            vmem_limit_bytes=vmem_limit),
    )(xt, x)


# ---------------------------------------------------------------------------
# Kernel 2: fused neighbour gather + 1x1 conv + max-k + BN(eval) + LeakyReLU
#   idx_ref : SMEM, flat (N*L*k,) int32 kNN table (scalar-prefetched)
#   xt_ref  : (1, L, C)  f32, per-batch point table, VMEM-resident
#   wa_ref  : (C, O)     bf16, W_a * bn_scale           (neighbour term)
#   wd_ref  : (C, O)     bf16, (W_b - W_a) * bn_scale   (centre term)
#   bias_ref: (1, O)     f32, folded BN bias
#   out_ref : (1, O, tm) f32, channels-first output tile
#   nbr_ref : VMEM scratch (k, tm, C) f32, gathered neighbour tile
# ---------------------------------------------------------------------------
def _edge_conv_kernel(idx_ref, xt_ref, wa_ref, wd_ref, bias_ref, out_ref, nbr_ref):
    n = pl.program_id(0)
    i = pl.program_id(1)
    k, tm, C = nbr_ref.shape
    L = xt_ref.shape[1]

    # ---- fused gather: nbr[j, v, :] = xt[idx[n, i*tm + v, j], :] ----------
    base = (n * L + i * tm) * k                    # flat offset into SMEM table

    @pl.loop(0, tm)
    def _(v):
        off = base + v * k
        for j in range(k):                         # k is small & static: unrolled
            row = idx_ref[off + j]
            nbr_ref[j, pl.ds(v, 1), :] = xt_ref[0, pl.ds(row, 1), :]

    # ---- one tall bf16 MXU matmul over all k neighbours of the tile -------
    # TODO(synk): chunk k with a running max if k*tm*O*4 ever nears the VMEM
    # budget (not needed at the tile sizes picked below).
    nbr = nbr_ref[...].astype(jnp.bfloat16).reshape(k * tm, C)
    y_n = jnp.dot(nbr, wa_ref[...], preferred_element_type=jnp.float32)   # (k*tm, O)

    # max over k FIRST (scale folded into weights; LeakyReLU is monotone and
    # the centre/bias terms are neighbour-independent, so this is exact).
    y = jnp.max(y_n.reshape(k, tm, -1), axis=0)                           # (tm, O)

    start = pl.multiple_of(i * tm, tm)
    ctr = xt_ref[0, pl.ds(start, tm), :].astype(jnp.bfloat16)             # (tm, C)
    y = y + jnp.dot(ctr, wd_ref[...], preferred_element_type=jnp.float32)
    y = y + bias_ref[...]                                                 # folded BN bias
    y = jnp.where(y >= 0.0, y, 0.2 * y)                                   # LeakyReLU(0.2)

    # channels-first store: (tm, O) -> (O, tm) on the k-reduced tile (XLU slot)
    out_ref[0] = jnp.transpose(y, (1, 0)).astype(out_ref.dtype)


def edge_conv_pallas(idx_flat, xt, wa, wd, bias, *, k, tm, vmem_limit):
    N, L, C = xt.shape
    O = wa.shape[1]
    return pl.pallas_call(
        _edge_conv_kernel,
        out_shape=jax.ShapeDtypeStruct((N, O, L), jnp.float32),
        grid_spec=pltpu.PrefetchScalarGridSpec(
            num_scalar_prefetch=1,                       # idx -> SMEM
            grid=(N, L // tm),
            in_specs=[
                pl.BlockSpec((1, L, C), lambda n, i, idx: (n, 0, 0)),  # xt resident
                pl.BlockSpec((C, O),    lambda n, i, idx: (0, 0)),     # W_a * scale
                pl.BlockSpec((C, O),    lambda n, i, idx: (0, 0)),     # (W_b - W_a) * scale
                pl.BlockSpec((1, O),    lambda n, i, idx: (0, 0)),     # BN bias
            ],
            out_specs=pl.BlockSpec((1, O, tm), lambda n, i, idx: (n, 0, i)),
            scratch_shapes=[pltpu.VMEM((k, tm, C), jnp.float32)],
        ),
        compiler_params=pltpu.CompilerParams(
            dimension_semantics=("parallel", "parallel"),
            vmem_limit_bytes=vmem_limit),
    )(idx_flat, xt, wa, wd, bias)


# ---------------------------------------------------------------------------
# Full EdgeConv.forward:  x (N, C, L) -> (N, out_channels, L)
# ---------------------------------------------------------------------------
def edge_conv_forward(x, w_t, bn_scale, bn_bias, k):
    N, C, L = x.shape
    O = w_t.shape[1]

    cap = _vmem_capacity_bytes()
    budget = int(cap * 0.6)                 # tile-sizing budget
    vmem_limit = int(cap * 0.8)             # explicit scoped-VMEM limit

    # ---- kNN: Pallas distance kernel (f32) + XLA top_k --------------------
    xt = jnp.transpose(x, (0, 2, 1))                        # (N, L, C) f32
    max_tq = max(8, (budget // 4 - 2 * C * L) // (2 * (C + L)))
    tq = _pick_tile(L, min(512, max_tq), 8)
    pd = pairwise_distance(xt, x, tq=tq, vmem_limit=vmem_limit)   # (N, L, L)
    _, idx = lax.top_k(pd, k)                               # (N, L, k) int32
    idx_flat = idx.astype(jnp.int32).reshape(-1)            # flat SMEM table

    # ---- fold BN scale into the split conv weights (epilogue reorder) -----
    #   edge @ W == nbr @ W_a + ctr @ (W_b - W_a)
    w_a = w_t[:C]
    w_b = w_t[C:2 * C]
    scale = bn_scale.reshape(1, O).astype(jnp.float32)
    wa = (w_a * scale).astype(jnp.bfloat16)                 # (C, O)
    wd = ((w_b - w_a) * scale).astype(jnp.bfloat16)         # (C, O)
    bias = bn_bias.reshape(1, O).astype(jnp.float32)

    # ---- edge kernel tile: budget-aware, <=256 rows (128 preferred on v5e) -
    denom = 8 * O + 4 * k * C + 8 * k * O
    max_tm = max(8, (budget - 8 * L * C) // denom)
    tm = _pick_tile(L, min(256, max_tm), 8)

    # (N, O, L) channels-first straight from the kernel
    return edge_conv_pallas(idx_flat, xt, wa, wd, bias,
                            k=k, tm=tm, vmem_limit=vmem_limit)


if __name__ == "__main__":
    N, C, L, K, O = 2, 4, 16, 8, 32
    key = jax.random.PRNGKey(0)
    kx, kw = jax.random.split(key)

    x = jax.random.normal(kx, (N, C, L), jnp.float32)

    # Conv2d(2C, O, kernel_size=1, bias=False), kaiming_normal_(mode='fan_out'):
    # std = sqrt(2 / fan_out), fan_out = O * 1 * 1
    w = jax.random.normal(kw, (O, 2 * C), jnp.float32) * math.sqrt(2.0 / O)
    w_t = jnp.transpose(w)                                  # (2C, O)

    # BatchNorm2d(O): gamma=1 (bn_init scale=1), beta=0, running stats (0, 1), eps=1e-5
    eps = 1e-5
    gamma = jnp.ones((O,), jnp.float32)
    beta = jnp.zeros((O,), jnp.float32)
    r_mean = jnp.zeros((O,), jnp.float32)
    r_var = jnp.ones((O,), jnp.float32)
    bn_scale = (gamma / jnp.sqrt(r_var + eps)).reshape(1, O)
    bn_bias = (beta - r_mean * gamma / jnp.sqrt(r_var + eps)).reshape(1, O)

    out = jax.block_until_ready(edge_conv_forward(x, w_t, bn_scale, bn_bias, K))
    assert out.shape == (N, O, L), out.shape

    # Pure-JAX f32 reference for sanity (conv -> BN -> LeakyReLU -> max over k).
    xt = jnp.transpose(x, (0, 2, 1))
    pd_ref = (2.0 * jnp.einsum('nic,njc->nij', xt, xt)
              - jnp.sum(xt * xt, -1)[:, :, None]
              - jnp.sum(xt * xt, -1)[:, None, :])
    _, idx = lax.top_k(pd_ref, K)
    nbrs = xt[jnp.arange(N)[:, None, None], idx]
    center = jnp.broadcast_to(xt[:, :, None, :], (N, L, K, C))
    edge = jnp.concatenate([nbrs - center, center], axis=-1)
    y = jnp.einsum('nvkc,co->nvko', edge, w_t) * bn_scale[0] + bn_bias[0]
    y = jnp.where(y >= 0, y, 0.2 * y)
    ref = jnp.transpose(jnp.max(y, axis=2), (0, 2, 1))
    assert jnp.allclose(out, ref, atol=2e-2, rtol=2e-2), \
        float(jnp.max(jnp.abs(out - ref)))

    print("KERNEL_OK")
</pallas_src>

<mosaic_0001>
module attributes {stable_mosaic.version = 11 : i64} {
  func.func @_pairwise_dist_kernel(%arg0: i32, %arg1: i32, %arg2: memref<1x16x4xf32, #tpu.memory_space<vmem>>, %arg3: memref<1x4x16xf32, #tpu.memory_space<vmem>>, %arg4: memref<1x16x16xf32, #tpu.memory_space<vmem>>) attributes {dimension_semantics = [#tpu.dimension_semantics<parallel>, #tpu.dimension_semantics<parallel>], iteration_bounds = array<i64: 2, 1>, scalar_prefetch = 0 : i64, scratch_operands = 0 : i64, tpu.core_type = #tpu.core_type<tc>, window_params = [{transform_indices = @transform_0, window_bounds = array<i64: 1, 16, 4>}, {transform_indices = @transform_1, window_bounds = array<i64: 1, 4, 16>}, {transform_indices = @transform_2, window_bounds = array<i64: 1, 16, 16>}]} {
    %c0 = arith.constant 0 : index
    %c0_0 = arith.constant 0 : index
    %c0_1 = arith.constant 0 : index
    %0 = vector.load %arg2[%c0, %c0_0, %c0_1] : memref<1x16x4xf32, #tpu.memory_space<vmem>>, vector<1x16x4xf32>
    %1 = vector.shape_cast %0 : vector<1x16x4xf32> to vector<16x4xf32>
    %c0_2 = arith.constant 0 : index
    %c0_3 = arith.constant 0 : index
    %c0_4 = arith.constant 0 : index
    %2 = vector.load %arg3[%c0_2, %c0_3, %c0_4] : memref<1x4x16xf32, #tpu.memory_space<vmem>>, vector<1x4x16xf32>
    %3 = vector.shape_cast %2 : vector<1x4x16xf32> to vector<4x16xf32>
    %cst = arith.constant dense<0.000000e+00> : vector<16x16xf32>
    %4 = tpu.matmul %1, %3, %cst {dimension_numbers = #tpu.dot_dimension_numbers<[1], [0], [0], [1], [0, 0, 1, 1], [], []>} : vector<16x4xf32>, vector<4x16xf32>, vector<16x16xf32> -> vector<16x16xf32>
    %5 = arith.mulf %3, %3 : vector<4x16xf32>
    %cst_5 = arith.constant dense<0.000000e+00> : vector<16xf32>
    %6 = vector.multi_reduction <add>, %5, %cst_5 [0] : vector<4x16xf32> to vector<16xf32>
    %7 = vector.shape_cast %6 : vector<16xf32> to vector<1x16xf32>
    %8 = arith.mulf %1, %1 : vector<16x4xf32>
    %cst_6 = arith.constant dense<0.000000e+00> : vector<16xf32>
    %9 = vector.multi_reduction <add>, %8, %cst_6 [1] : vector<16x4xf32> to vector<16xf32>
    %10 = vector.shape_cast %9 : vector<16xf32> to vector<16x1xf32>
    %cst_7 = arith.constant 2.000000e+00 : f32
    %11 = vector.broadcast %cst_7 : f32 to vector<16x16xf32>
    %12 = arith.mulf %11, %4 : vector<16x16xf32>
    %13 = vector.broadcast %10 : vector<16x1xf32> to vector<16x16xf32>
    %14 = arith.subf %12, %13 : vector<16x16xf32>
    %15 = vector.broadcast %7 : vector<1x16xf32> to vector<16x16xf32>
    %16 = arith.subf %14, %15 : vector<16x16xf32>
    %c0_8 = arith.constant 0 : index
    %c0_9 = arith.constant 0 : index
    %c0_10 = arith.constant 0 : index
    %17 = vector.load %arg4[%c0_8, %c0_9, %c0_10] : memref<1x16x16xf32, #tpu.memory_space<vmem>>, vector<1x16x16xf32>
    %18 = vector.shape_cast %17 : vector<1x16x16xf32> to vector<16x16xf32>
    %19 = vector.shape_cast %16 : vector<16x16xf32> to vector<1x16x16xf32>
    tpu.vector_store %arg4[%c0_8, %c0_9, %c0_10], %19 {strides = array<i32>} : memref<1x16x16xf32, #tpu.memory_space<vmem>>, vector<1x16x16xf32>,
    return
  }
  func.func @transform_0(%arg0: i32, %arg1: i32) -> (i32, i32, i32) {
    %c0_i32 = arith.constant 0 : i32
    %c0_i32_0 = arith.constant 0 : i32
    return %arg0, %arg1, %c0_i32 : i32, i32, i32
  }
  func.func @transform_1(%arg0: i32, %arg1: i32) -> (i32, i32, i32) {
    %c0_i32 = arith.constant 0 : i32
    %c0_i32_0 = arith.constant 0 : i32
    %c0_i32_1 = arith.constant 0 : i32
    return %arg0, %c0_i32, %c0_i32_0 : i32, i32, i32
  }
  func.func @transform_2(%arg0: i32, %arg1: i32) -> (i32, i32, i32) {
    %c0_i32 = arith.constant 0 : i32
    %c0_i32_0 = arith.constant 0 : i32
    return %arg0, %arg1, %c0_i32 : i32, i32, i32
  }
}

</mosaic_0001>

<llo_original>
// kernel: tpu_custom_call.1
$region0: #{tpu_custom_call.1}
  #allocation0 [shape = 'u32[]', space=smem, size = 0x4, offset = 0x4, fixed_abs, tag = 'smem constant byte address 0x4 - core index']
  #allocation1 [shape = 'u32[144,128]{1,0:T(1,128)}', space=vmem, size = 0x12000, scoped, tag = 'internal scratch']
  %s0 = inlined_call_operand.vmem [shape: f32[2,16,4], index: 0, kind: input, shape index: {}]
  %s1 = inlined_call_operand.vmem [shape: f32[2,4,16], index: 1, kind: input, shape index: {}]
  %s2 = inlined_call_operand.hbm [shape: f32[2,16,16], index: 2, kind: output, shape index: {}]
  %s3 = sld [smem:[#allocation0]]
  $region41: #{tpu_custom_call.1} parent=0
    _
  %s5 = ssub.s32 1, %s3
  %s6 = scalar_select 0, %s5, %s3
  $region1: #{tpu_custom_call.1} parent=0
    #allocation2 [shape = 'u8[16384]{0}', space=vmem, size = 0x4000, scoped, tag = 'output window, operand 0']
    #allocation3 [shape = 's32[2]{0}', space=sflag, size = 0x8, scoped, tag = 'scoped memory for tpu_custom_call.1']
    %7 = vsyncpa [#allocation3], 0
    %s8 = scalar_lea.sflag [#allocation3], 1
    %9 = vsyncpa %s8, 0
    loop: start=0, step=1, limit=4
    $region2: #{tpu_custom_call.1} parent=1 // loop_pre_header
      _
    $region3: #{tpu_custom_call.1} parent=1 // loop_header
      %s11 = sphi 0, %s15
      %p12 = scmp.ge.s32.totalorder %s11, 4
      %s18 = sphi 0, %s30
      %s19 = sphi 0, %s26
      %s20 = sphi 0, %s18
      %s21 = sphi 0, %s19
      %s22 = sphi 0, %s20
      %s23 = sphi 0, %s21
      %s35 = sphi 0, %s37
      %s38 = sphi 0, %s35
      %s39 = sphi 0, %s38
      %s55 = sphi 0, %s39
      %s61 = sphi 0, %s63
      %s64 = sphi 0, %s61
      %s65 = sphi 0, %s64
      %s81 = sphi 0, %s65
      %s89 = sphi 0, %s91
      %s92 = sphi 0, %s89
      %s93 = sphi 0, %s92
      %s109 = sphi 0, %s93
    $region4: #{tpu_custom_call.1} parent=1 // loop_header_branch
      %14 = sbr.rel (%p12) target = $region8
    $region5: #{tpu_custom_call.1} parent=1 // loop_body
      %s16 = ssub.s32 %s11, 1
      %s17 = ssub.s32 %s11, 2
      %s24 = sadd.s32 1, %s19
      %p25 = scmp.ge.s32.totalorder %s24, 1
      %s26 = scalar_select %p25, 0, %s24
      %s27 = sadd.s32 1, %s18
      %s28 = scalar_select %p25, %s27, %s18
      %p29 = scmp.ge.s32.totalorder %s28, 2
      %s30 = scalar_select %p29, 0, %s28
      %s31 = ssub.s32 %s18, %s30
      %s32 = ssub.s32 %s19, %s26
      %s33 = sor.u32 %s31, %s32
      %p34 = scmp.eq.s32.totalorder %s33, 0
      %s36 = sadd.s32 %s35, 1
      %s37 = scalar_select %p34, %s35, %s36
      %p40 = pneg %p34
      %p41 = scmp.eq.s32.totalorder %s11, 1
      %p42 = por %p40, %p41
      %p43 = scmp.ne.s32.totalorder %s35, %s38
      %p44 = scmp.eq.s32.totalorder %s11, 0
      %p45 = por %p43, %p44
      %p46 = scmp.ne.s32.totalorder %s35, %s38
      %p47 = scmp.eq.s32.totalorder %s16, 1
      %p48 = por %p46, %p47
      %p49 = scmp.ne.s32.totalorder %s38, %s39
      %p50 = scmp.eq.s32.totalorder %s16, 0
      %p51 = por %p49, %p50
      %p52 = scmp.ne.s32.totalorder %s38, %s39
      %p53 = scmp.eq.s32.totalorder %s17, 1
      %p54 = por %p52, %p53
      %p56 = scmp.ne.s32.totalorder %s39, %s55
      %p57 = scmp.eq.s32.totalorder %s17, 0
      %p58 = por %p56, %p57
      %s59 = ssub.s32 %s18, %s30
      %p60 = scmp.eq.s32.totalorder %s59, 0
      %s62 = sadd.s32 %s61, 1
      %s63 = scalar_select %p60, %s61, %s62
      %p66 = pneg %p60
      %p67 = scmp.eq.s32.totalorder %s11, 1
      %p68 = por %p66, %p67
      %p69 = scmp.ne.s32.totalorder %s61, %s64
      %p70 = scmp.eq.s32.totalorder %s11, 0
      %p71 = por %p69, %p70
      %p72 = scmp.ne.s32.totalorder %s61, %s64
      %p73 = scmp.eq.s32.totalorder %s16, 1
      %p74 = por %p72, %p73
      %p75 = scmp.ne.s32.totalorder %s64, %s65
      %p76 = scmp.eq.s32.totalorder %s16, 0
      %p77 = por %p75, %p76
      %p78 = scmp.ne.s32.totalorder %s64, %s65
      %p79 = scmp.eq.s32.totalorder %s17, 1
      %p80 = por %p78, %p79
      %p82 = scmp.ne.s32.totalorder %s65, %s81
      %p83 = scmp.eq.s32.totalorder %s17, 0
      %p84 = por %p82, %p83
      %s85 = ssub.s32 %s18, %s30
      %s86 = ssub.s32 %s19, %s26
      %s87 = sor.u32 %s85, %s86
      %p88 = scmp.eq.s32.totalorder %s87, 0
      %s90 = sadd.s32 %s89, 1
      %s91 = scalar_select %p88, %s89, %s90
      %p94 = pneg %p88
      %p95 = scmp.eq.s32.totalorder %s11, 1
      %p96 = por %p94, %p95
      %p97 = scmp.ne.s32.totalorder %s89, %s92
      %p98 = scmp.eq.s32.totalorder %s11, 0
      %p99 = por %p97, %p98
      %p100 = scmp.ne.s32.totalorder %s89, %s92
      %p101 = scmp.eq.s32.totalorder %s16, 1
      %p102 = por %p100, %p101
      %p103 = scmp.ne.s32.totalorder %s92, %s93
      %p104 = scmp.eq.s32.totalorder %s16, 0
      %p105 = por %p103, %p104
      %p106 = scmp.ne.s32.totalorder %s92, %s93
      %p107 = scmp.eq.s32.totalorder %s17, 1
      %p108 = por %p106, %p107
      %p110 = scmp.ne.s32.totalorder %s93, %s109
      %p111 = scmp.eq.s32.totalorder %s17, 0
      %p112 = por %p110, %p111
      %p113 = scmp.le.s32.totalorder 1, %s11
      %p114 = scmp.lt.s32.totalorder %s11, 3
      %p115 = pnand %p113, %p114
      %p116 = pneg %p115
      // Predicated region
      $region9: #{tpu_custom_call.1} parent=5 // pred_check
        _
      $region10: #{tpu_custom_call.1} parent=5 // pred_check_branch
        %118 = sbr.rel (%p115) target = $region12
      $region11: #{tpu_custom_call.1} parent=5 // pred_region
        %s119 = ssub.s32 %s11, 1
      $region12: #{tpu_custom_call.1} parent=5 // pred_fallthru
        _
      %p120 = scmp.lt.s32.totalorder %s11, 2
      // Predicated region
      $region13: #{tpu_custom_call.1} parent=5 // pred_check
        %p121 = pneg %p120
      $region14: #{tpu_custom_call.1} parent=5 // pred_check_branch
        %123 = sbr.rel (%p121) target = $region16
      $region15: #{tpu_custom_call.1} parent=5 // pred_region
        // Predicated region
        $region17: #{tpu_custom_call.1} parent=15 // pred_check
          %p124 = pneg %p45
        $region18: #{tpu_custom_call.1} parent=15 // pred_check_branch
          %126 = sbr.rel (%p124) target = $region20
        $region19: #{tpu_custom_call.1} parent=15 // pred_region
          %s127 = smul.u32 2, %s19
          %p128 = scmp.lt.s32.totalorder %s18, 1
          %s129 = scalar_select %p128, %s18, 1
          %p130 = scmp.lt.s32.totalorder %s127, 1
          %s131 = scalar_select %p130, %s127, 1
          %s132 = smul.addr %s129, 2
          %s133 = sadd.s32 %s131, %s132
          %s134 = smul.addr %s133, 8
          %s135 = scalar_lea.vmem %s0, %s134
          %s136 = smul.u32 2, %s19
        $region20: #{tpu_custom_call.1} parent=15 // pred_fallthru
          _
        // Predicated region
        $region21: #{tpu_custom_call.1} parent=15 // pred_check
          %p137 = pneg %p71
        $region22: #{tpu_custom_call.1} parent=15 // pred_check_branch
          %139 = sbr.rel (%p137) target = $region24
        $region23: #{tpu_custom_call.1} parent=15 // pred_region
          %p140 = scmp.lt.s32.totalorder %s18, 1
          %s141 = scalar_select %p140, %s18, 1
          %s142 = smul.addr %s141, 4
          %s143 = scalar_lea.vmem %s1, %s142
        $region24: #{tpu_custom_call.1} parent=15 // pred_fallthru
          _
      $region16: #{tpu_custom_call.1} parent=5 // pred_fallthru
        _
      %p144 = scmp.le.s32.totalorder 1, %s11
      %p145 = scmp.lt.s32.totalorder %s11, 3
      %p146 = pnand %p144, %p145
      %p147 = pneg %p146
      // Predicated region
      $region25: #{tpu_custom_call.1} parent=5 // pred_check
        _
      $region26: #{tpu_custom_call.1} parent=5 // pred_check_branch
        %149 = sbr.rel (%p146) target = $region28
      $region27: #{tpu_custom_call.1} parent=5 // pred_region
        %s150 = ssub.s32 %s11, 1
        %s151 = smul.u32 2, %s21
        %p152 = scmp.lt.s32.totalorder %s20, 1
        %s153 = scalar_select %p152, %s20, 1
        %p154 = scmp.lt.s32.totalorder %s151, 1
        %s155 = scalar_select %p154, %s151, 1
        %s156 = smul.addr %s153, 2
        %s157 = sadd.s32 %s155, %s156
        %s158 = smul.addr %s157, 8
        %s159 = scalar_lea.vmem %s0, %s158
        %p160 = pneg %p51
        %p161 = pneg %p48
        %p162 = scmp.lt.s32.totalorder %s20, 1
        %s163 = scalar_select %p162, %s20, 1
        %s164 = smul.addr %s163, 4
        %s165 = scalar_lea.vmem %s1, %s164
        %p166 = pneg %p77
        %p167 = pneg %p74
        %p168 = pneg %p105
        %p169 = pneg %p102
        %s170 = sand.u32 %s92, 1
        %s171 = scalar_lea.sflag [#allocation3], %s170
        %s172 = sand.u32 %s92, 1
        %s173 = smul.addr %s172, 16
        %s174 = scalar_lea.vmem [#allocation2], %s173
        %s175 = smul.u32 2, %s21
        %p176 = scmp.lt.s32.totalorder %s20, 1
        %s177 = scalar_select %p176, %s20, 1
        %p178 = scmp.lt.s32.totalorder %s175, 1
        %s179 = scalar_select %p178, %s175, 1
        %s180 = smul.addr %s177, 2
        %s181 = sadd.s32 %s179, %s180
        %s182 = smul.addr %s181, 8
        %s183 = scalar_lea.vmem %s0, %s182
        %s184 = smul.u32 2, %s21
        %p185 = scmp.lt.s32.totalorder %s20, 1
        %s186 = scalar_select %p185, %s20, 1
        %s187 = smul.addr %s186, 4
        %s188 = scalar_lea.vmem %s1, %s187
        %s189 = smul.u32 2, %s21
        %v190 = vld [vmem:[%s183] sm:$0xff]
        %v191 = vld [vmem:[%s183 + $0x8] sm:$0xff]
        %v192 = vld [vmem:[%s188] sm:$0xf]
        %vm193 = vcmask 31744
        %v195 = vsel %vm193, %v190, 0
        %v198 = vsel %vm193, %v191, 0
        %vm200 = vcmask 1043456
        %v202 = vsel %vm200, %v192, 0
        %204 = vmatprep.subr.mxu0 0.0
        %205 = vmatpush1.msra.mxu0 %v202
        %206 = vmatprep.subr.mxu0 0.0
        %207 = vmatpush1.msra.mxu0 0.0
        %208 = vmatprep.subr.mxu0 0.0
        %209 = vmatpush1.msra.mxu0 0.0
        %210 = vmatprep.subr.mxu0 0.0
        %211 = vmatpush1.msra.mxu0 0.0
        %212 = vmatprep.subr.mxu0 0.0
        %213 = vmatpush1.msra.mxu0 0.0
        %214 = vmatprep.subr.mxu0 0.0
        %215 = vmatpush1.msra.mxu0 0.0
        %216 = vmatprep.subr.mxu0 0.0
        %217 = vmatpush1.msra.mxu0 0.0
        %218 = vmatprep.subr.mxu0 0.0
        %219 = vmatpush1.msra.mxu0 0.0
        %220 = vmatprep.subr.mxu0 0.0
        %221 = vmatpush1.msra.mxu0 0.0
        %222 = vmatprep.subr.mxu0 0.0
        %223 = vmatpush1.msra.mxu0 0.0
        %224 = vmatprep.subr.mxu0 0.0
        %225 = vmatpush1.msra.mxu0 0.0
        %226 = vmatprep.subr.mxu0 0.0
        %227 = vmatpush1.msra.mxu0 0.0
        %228 = vmatprep.subr.mxu0 0.0
        %229 = vmatpush1.msra.mxu0 0.0
        %230 = vmatprep.subr.mxu0 0.0
        %231 = vmatpush1.msra.mxu0 0.0
        %232 = vmatprep.subr.mxu0 0.0
        %233 = vmatpush1.msra.mxu0 0.0
        %234 = vmatprep.subr.mxu0 0.0
        %235 = vmatpush1.msra.mxu0 0.0
        %236 = vmatprep.subr.mxu0 0.0
        %237 = vmatpush1.msra.mxu0 0.0
        %238 = vmatprep.subr.mxu0 0.0
        %239 = vmatpush1.msra.mxu0 0.0
        %240 = vmatprep.subr.mxu0 0.0
        %241 = vmatpush1.msra.mxu0 0.0
        %242 = vmatprep.subr.mxu0 0.0
        %243 = vmatpush1.msra.mxu0 0.0
        %244 = vmatprep.subr.mxu0 0.0
        %245 = vmatpush1.msra.mxu0 0.0
        %246 = vmatprep.subr.mxu0 0.0
        %247 = vmatpush1.msra.mxu0 0.0
        %248 = vmatprep.subr.mxu0 0.0
        %249 = vmatpush1.msra.mxu0 0.0
        %250 = vmatprep.subr.mxu0 0.0
        %251 = vmatpush1.msra.mxu0 0.0
        %252 = vmatprep.subr.mxu0 0.0
        %253 = vmatpush1.msra.mxu0 0.0
        %254 = vmatprep.subr.mxu0 0.0
        %255 = vmatpush1.msra.mxu0 0.0
        %256 = vmatprep.subr.mxu0 0.0
        %257 = vmatpush1.msra.mxu0 0.0
        %258 = vmatprep.subr.mxu0 0.0
        %259 = vmatpush1.msra.mxu0 0.0
        %260 = vmatprep.subr.mxu0 0.0
        %261 = vmatpush1.msra.mxu0 0.0
        %262 = vmatprep.subr.mxu0 0.0
        %263 = vmatpush1.msra.mxu0 0.0
        %264 = vmatprep.subr.mxu0 0.0
        %265 = vmatpush1.msra.mxu0 0.0
        %266 = vmatprep.subr.mxu0 0.0
        %267 = vmatpush1.msra.mxu0 0.0
        %268 = vmatprep.mubr.f32.mxu0 0.0
        %269 = vmatmul.mubr.f32.gmra.mrb[0].mxu0 %v195
        %v270 = vpop.f32.mrb[0].mxu0
        %v271 = vadd.f32 0.0, %v270
        %v272 = vpop.f32.mrb[0].mxu0
        %273 = vmatprep.mubr.f32.mxu0 0.0
        %274 = vmatmul.mubr.f32.gmra.mrb[0].mxu0 %v198
        %v275 = vpop.f32.mrb[0].mxu0
        %v276 = vadd.f32 0.0, %v275
        %v277 = vpop.f32.mrb[0].mxu0
        %278 = vdwg.mxu0
        %v279 = vmul.f32 %v192, %v192
        %vm280 = vcmask 125952
        %v281 = vsel %vm280, %v279, 0.0
        %v282 = vrot.slane %v281, 4
        %v283 = vadd.f32 %v281, %v282
        %v284 = vrot.slane %v283, 2
        %v285 = vadd.f32 %v283, %v284
        %v286 = vrot.slane %v285, 1
        %v287 = vadd.f32 %v285, %v286
        %v288 = vmul.f32 %v190, %v190
        %v289 = vmul.f32 %v191, %v191
        %v290 = vsel %vm193, %v288, 0.0
        %291 = vadd.xlane.f32.xlu0 %v290
        %v292 = vpop.xlane.xlu0 %291
        %v293 = vsel %vm193, %v289, 0.0
        %294 = vadd.xlane.f32.xlu0 %v293
        %v295 = vpop.xlane.xlu0 %294
        %v296 = vmul.f32 %v271, 2.0
        %v297 = vmul.f32 %v276, 2.0
        %v298 = vsub.f32 %v296, %v292
        %v299 = vsub.f32 %v297, %v295
        %v300 = vsub.f32 %v298, %v287
        %v301 = vsub.f32 %v299, %v287
        %vm302 = vcmask 130048
        %303 = vst.msk [vmem:[%s174] sm:$0xff] %vm302, %v300
        %304 = vst.msk [vmem:[%s174 + $0x8] sm:$0xff] %vm302, %v301
        %s305 = sand.u32 %s92, 1
        %s306 = scalar_lea.sflag [#allocation3], %s305
        %s307 = sand.u32 %s92, 1
        %s308 = smul.addr %s307, 16
        %s309 = scalar_lea.vmem [#allocation2], %s308
        // Predicated region
        $region29: #{tpu_custom_call.1} parent=27 // pred_check
          %p310 = pneg %p102
        $region30: #{tpu_custom_call.1} parent=27 // pred_check_branch
          %312 = sbr.rel (%p310) target = $region32
        $region31: #{tpu_custom_call.1} parent=27 // pred_region
          %s313 = smul.u32 2, %s21
          %s315 = ssub.s32 256, 256
          %316 = vsyncadd %s306, %s315
          %s317 = smul.addr %s20, 2
          %s318 = sadd.s32 %s313, %s317
          %s319 = smul.addr %s318, 128
          %s320 = scalar_lea.hbm %s2, %s319
          %s321 = sshll.u32 %s309, 4
          %s322 = int_to_ptr.vmem [resolvable:$true] %s321
          %327 = dma.vmem_to_hbm [thread:$0]  %s322, 256, %s320, %s306, 128, 128, 8
        $region32: #{tpu_custom_call.1} parent=27 // pred_fallthru
          _
      $region28: #{tpu_custom_call.1} parent=5 // pred_fallthru
        _
      %p328 = scmp.le.s32.totalorder 2, %s11
      // Predicated region
      $region33: #{tpu_custom_call.1} parent=5 // pred_check
        %p329 = pneg %p328
      $region34: #{tpu_custom_call.1} parent=5 // pred_check_branch
        %331 = sbr.rel (%p329) target = $region36
      $region35: #{tpu_custom_call.1} parent=5 // pred_region
        %s332 = ssub.s32 %s11, 2
        // Predicated region
        $region37: #{tpu_custom_call.1} parent=35 // pred_check
          %p333 = pneg %p108
        $region38: #{tpu_custom_call.1} parent=35 // pred_check_branch
          %335 = sbr.rel (%p333) target = $region40
        $region39: #{tpu_custom_call.1} parent=35 // pred_region
          %s336 = sand.u32 %s93, 1
          %s337 = scalar_lea.sflag [#allocation3], %s336
          %s338 = sand.u32 %s93, 1
          %s339 = smul.addr %s338, 16
          %s340 = scalar_lea.vmem [#allocation2], %s339
          %341 = dma.done %s337, 256
        $region40: #{tpu_custom_call.1} parent=35 // pred_fallthru
          _
      $region36: #{tpu_custom_call.1} parent=5 // pred_fallthru
        _
    $region6: #{tpu_custom_call.1} parent=1 // loop_footer
      %s15 = sadd.s32 1, %s11
    $region7: #{tpu_custom_call.1} parent=1 // loop_footer_branch
      %10 = sbr.rel target = $region3
    $region8: #{tpu_custom_call.1} parent=1 // loop_exit
      _
    %342 = vsyncpa [#allocation3], 1
    %s343 = scalar_lea.sflag [#allocation3], 1
    %344 = vsyncpa %s343, 1

</llo_original>
